<compile_context>
chip_gen: v5e
topology: v5e:2x2
jax: 0.10.0
libtpu: 0.0.40
codegen_flags: <defaults>
</compile_context>

<pallas_src>
import jax
import jax.numpy as jnp
from jax.experimental import pallas as pl
from jax.experimental.pallas import tpu as pltpu


def _fusion_kernel(g_ref, l_ref, wg_ref, wl_ref, b_ref, o_ref):
    # g_ref: (TB, Fg), l_ref: (TB, Fl), wg_ref: (Fg, O) bf16, wl_ref: (Fl, O) bf16,
    # b_ref: (1, O) f32, o_ref: (TB, O) f32.
    g = g_ref[...].astype(jnp.bfloat16)
    l = l_ref[...].astype(jnp.bfloat16)
    # Split-K: two MXU dots, fp32 accumulation.  Equivalent to concat([g,l]) @ W.T.
    acc = jnp.dot(g, wg_ref[...], preferred_element_type=jnp.float32)
    acc = acc + jnp.dot(l, wl_ref[...], preferred_element_type=jnp.float32)
    acc = acc + b_ref[...]  # fp32 bias add, broadcast over rows.
    # sigmoid(x) = 1 / (1 + exp(-x)); exp and approx reciprocal both on the EUP slot.
    o_ref[...] = pl.reciprocal(1.0 + jnp.exp(-acc), approx=True).astype(o_ref.dtype)


def init_fusion_branch_params(weight, bias, num_global_features, *, param_dtype=jnp.bfloat16):
    """One-time parameter prep (module init).

    weight: [O, Fg+Fl] (PyTorch nn.Linear layout), bias: [O].
    Returns (Wg_T, Wl_T, b2): the transposed weight split along K into the global /
    local halves (so the kernel never concatenates activations), stored in bf16;
    bias reshaped to (1, O) fp32.  No per-call transpose/reshape/concat remains.
    """
    w = jnp.asarray(weight)
    fg = int(num_global_features)
    wg_t = w[:, :fg].T.astype(param_dtype)                     # (Fg, O)
    wl_t = w[:, fg:].T.astype(param_dtype)                     # (Fl, O)
    b2 = jnp.asarray(bias, dtype=jnp.float32).reshape(1, -1)   # (1, O)
    return wg_t, wl_t, b2


def _round_up(x, m):
    return ((x + m - 1) // m) * m


def fusion_branch_forward(params, global_pool, local_pool, *,
                          small_batch_cutoff=128, max_batch_tile=4096):
    """y = sigmoid(cat([global_pool, local_pool], 1) @ W.T + b) via a Pallas kernel."""
    wg_t, wl_t, b2 = params
    B, Fg = global_pool.shape
    Bl, Fl = local_pool.shape
    assert B == Bl
    assert wg_t.shape[0] == Fg and wl_t.shape[0] == Fl
    O = wg_t.shape[1]
    assert wl_t.shape[1] == O and b2.shape == (1, O)
    K = Fg + Fl

    act_bytes = (B * Fg * global_pool.dtype.itemsize
                 + B * Fl * local_pool.dtype.itemsize)
    param_bytes = (wg_t.size + wl_t.size) * wg_t.dtype.itemsize + b2.size * 4
    cost = pl.CostEstimate(
        flops=2 * B * K * O,
        transcendentals=B * O,
        bytes_accessed=act_bytes + param_bytes + B * O * 4,
    )

    if B <= small_batch_cutoff:
        # Single no-grid invocation: no pipeline prologue/epilogue.
        # TODO(synk): for genuinely tiny batches, fuse this epilogue into the
        # producer (pooling) kernel so the activations never round-trip HBM.
        return pl.pallas_call(
            _fusion_kernel,
            out_shape=jax.ShapeDtypeStruct((B, O), jnp.float32),
            in_specs=[pl.BlockSpec(memory_space=pltpu.MemorySpace.VMEM)] * 5,
            out_specs=pl.BlockSpec(memory_space=pltpu.MemorySpace.VMEM),
            cost_estimate=cost,
        )(global_pool, local_pool, wg_t, wl_t, b2)

    # Gridded path: tile only the batch axis.
    #  * >=2 grid steps so v7x's two TensorCores ("parallel") both get work,
    #  * capped at max_batch_tile rows, which amortizes the ~0.35us/step pipeline
    #    overhead on single-TC v5e/v6e while keeping the double-buffered working
    #    set at a few MB (inside every generation's scoped-VMEM default, so no
    #    vmem_limit_bytes override is needed).
    tb = max(8, min(max_batch_tile, _round_up(pl.cdiv(B, 2), 8)))
    nb = pl.cdiv(B, tb)
    return pl.pallas_call(
        _fusion_kernel,
        out_shape=jax.ShapeDtypeStruct((B, O), jnp.float32),
        grid=(nb,),
        in_specs=[
            pl.BlockSpec((tb, Fg), lambda i: (i, 0)),   # global_pool batch tile
            pl.BlockSpec((tb, Fl), lambda i: (i, 0)),   # local_pool batch tile
            pl.BlockSpec((Fg, O), lambda i: (0, 0)),    # Wg_T: stays VMEM-resident
            pl.BlockSpec((Fl, O), lambda i: (0, 0)),    # Wl_T: stays VMEM-resident
            pl.BlockSpec((1, O), lambda i: (0, 0)),     # bias: stays VMEM-resident
        ],
        out_specs=pl.BlockSpec((tb, O), lambda i: (i, 0)),
        compiler_params=pltpu.CompilerParams(
            dimension_semantics=("parallel",),
        ),
        cost_estimate=cost,
    )(global_pool, local_pool, wg_t, wl_t, b2)


if __name__ == "__main__":
    # Small shapes consistent with Fusion_Branch(input_size, output_size), where the
    # input is a concat of two pooled feature vectors.
    B = 8
    Fg = 128
    Fl = 128
    O = 16
    input_size = Fg + Fl

    key = jax.random.PRNGKey(0)
    k_g, k_l, k_w, k_b = jax.random.split(key, 4)

    global_pool = jax.random.normal(k_g, (B, Fg), dtype=jnp.float32)
    local_pool = jax.random.normal(k_l, (B, Fl), dtype=jnp.float32)

    # nn.Linear-style uniform(-1/sqrt(in), 1/sqrt(in)) init, PyTorch [out, in] layout.
    bound = 1.0 / (input_size ** 0.5)
    weight = jax.random.uniform(k_w, (O, input_size), dtype=jnp.float32,
                                minval=-bound, maxval=bound)
    bias = jax.random.uniform(k_b, (O,), dtype=jnp.float32,
                              minval=-bound, maxval=bound)

    # One-time param prep (module init), then the per-call forward.
    params = init_fusion_branch_params(weight, bias, Fg)

    def reference(gp, lp):
        fusion = jnp.concatenate([gp, lp], axis=1)
        logits = jnp.dot(fusion, weight.T, precision=jax.lax.Precision.HIGHEST) + bias
        return jax.nn.sigmoid(logits)

    # --- small-batch (no-grid) path ---
    out_small = jax.block_until_ready(fusion_branch_forward(params, global_pool, local_pool))
    ref_small = reference(global_pool, local_pool)
    assert out_small.shape == (B, O)
    # bf16 operands (fp32 accumulation) + approx-reciprocal sigmoid => small tolerance
    # on (0,1)-range outputs.
    assert jnp.allclose(out_small, ref_small, atol=1e-2, rtol=1e-2), \
        float(jnp.max(jnp.abs(out_small - ref_small)))

    # --- gridded (batch-tiled, "parallel") path, non-multiple-of-tile batch ---
    B2 = 300
    k_g2, k_l2 = jax.random.split(jax.random.PRNGKey(1), 2)
    gp2 = jax.random.normal(k_g2, (B2, Fg), dtype=jnp.float32)
    lp2 = jax.random.normal(k_l2, (B2, Fl), dtype=jnp.float32)
    out_big = jax.block_until_ready(fusion_branch_forward(params, gp2, lp2))
    ref_big = reference(gp2, lp2)
    assert out_big.shape == (B2, O)
    assert jnp.allclose(out_big, ref_big, atol=1e-2, rtol=1e-2), \
        float(jnp.max(jnp.abs(out_big - ref_big)))

    print("KERNEL_OK")
</pallas_src>

<mosaic_0001>
module attributes {stable_mosaic.version = 11 : i64} {
  func.func @_fusion_kernel(%arg0: memref<8x128xf32, #tpu.memory_space<vmem>>, %arg1: memref<8x128xf32, #tpu.memory_space<vmem>>, %arg2: memref<128x16xbf16, #tpu.memory_space<vmem>>, %arg3: memref<128x16xbf16, #tpu.memory_space<vmem>>, %arg4: memref<1x16xf32, #tpu.memory_space<vmem>>, %arg5: memref<8x16xf32, #tpu.memory_space<vmem>>) attributes {dimension_semantics = [], scalar_prefetch = 0 : i64, scratch_operands = 0 : i64, tpu.core_type = #tpu.core_type<tc>} {
    %c0 = arith.constant 0 : index
    %c0_0 = arith.constant 0 : index
    %0 = vector.load %arg0[%c0, %c0_0] : memref<8x128xf32, #tpu.memory_space<vmem>>, vector<8x128xf32>
    %1 = arith.truncf %0 : vector<8x128xf32> to vector<8x128xbf16>
    %c0_1 = arith.constant 0 : index
    %c0_2 = arith.constant 0 : index
    %2 = vector.load %arg1[%c0_1, %c0_2] : memref<8x128xf32, #tpu.memory_space<vmem>>, vector<8x128xf32>
    %3 = arith.truncf %2 : vector<8x128xf32> to vector<8x128xbf16>
    %c0_3 = arith.constant 0 : index
    %c0_4 = arith.constant 0 : index
    %4 = vector.load %arg2[%c0_3, %c0_4] : memref<128x16xbf16, #tpu.memory_space<vmem>>, vector<128x16xbf16>
    %cst = arith.constant dense<0.000000e+00> : vector<8x16xf32>
    %5 = tpu.matmul %1, %4, %cst {dimension_numbers = #tpu.dot_dimension_numbers<[1], [0], [0], [1], [0, 0, 1, 1], [], []>} : vector<8x128xbf16>, vector<128x16xbf16>, vector<8x16xf32> -> vector<8x16xf32>
    %c0_5 = arith.constant 0 : index
    %c0_6 = arith.constant 0 : index
    %6 = vector.load %arg3[%c0_5, %c0_6] : memref<128x16xbf16, #tpu.memory_space<vmem>>, vector<128x16xbf16>
    %cst_7 = arith.constant dense<0.000000e+00> : vector<8x16xf32>
    %7 = tpu.matmul %3, %6, %cst_7 {dimension_numbers = #tpu.dot_dimension_numbers<[1], [0], [0], [1], [0, 0, 1, 1], [], []>} : vector<8x128xbf16>, vector<128x16xbf16>, vector<8x16xf32> -> vector<8x16xf32>
    %8 = arith.addf %5, %7 : vector<8x16xf32>
    %c0_8 = arith.constant 0 : index
    %c0_9 = arith.constant 0 : index
    %9 = vector.load %arg4[%c0_8, %c0_9] : memref<1x16xf32, #tpu.memory_space<vmem>>, vector<1x16xf32>
    %10 = vector.broadcast %9 : vector<1x16xf32> to vector<8x16xf32>
    %11 = arith.addf %8, %10 : vector<8x16xf32>
    %cst_10 = arith.constant 0.000000e+00 : f32
    %12 = vector.broadcast %cst_10 : f32 to vector<8x16xf32>
    %13 = arith.subf %12, %11 : vector<8x16xf32>
    %14 = math.exp %13 : vector<8x16xf32>
    %cst_11 = arith.constant 1.000000e+00 : f32
    %15 = vector.broadcast %cst_11 : f32 to vector<8x16xf32>
    %16 = arith.addf %15, %14 : vector<8x16xf32>
    %17 = tpu.reciprocal %16 {approx = true} : vector<8x16xf32> -> vector<8x16xf32>
    %c0_12 = arith.constant 0 : index
    %c0_13 = arith.constant 0 : index
    %18 = vector.load %arg5[%c0_12, %c0_13] : memref<8x16xf32, #tpu.memory_space<vmem>>, vector<8x16xf32>
    tpu.vector_store %arg5[%c0_12, %c0_13], %17 {strides = array<i32>} : memref<8x16xf32, #tpu.memory_space<vmem>>, vector<8x16xf32>,
    return
  }
}

</mosaic_0001>

<llo_original>
// kernel: tpu_custom_call.1
$region0: #{tpu_custom_call.1}
  #allocation0 [shape = 'u32[]', space=smem, size = 0x4, offset = 0x4, fixed_abs, tag = 'smem constant byte address 0x4 - core index']
  #allocation1 [shape = 'u32[72,128]{1,0:T(1,128)}', space=vmem, size = 0x9000, scoped, tag = 'internal scratch']
  %s0 = inlined_call_operand.vmem [shape: f32[8,128], index: 0, kind: input, shape index: {}]
  %s1 = inlined_call_operand.vmem [shape: f32[8,128], index: 1, kind: input, shape index: {}]
  %s2 = inlined_call_operand.vmem [shape: bf16[128,16], index: 2, kind: input, shape index: {}]
  %s3 = inlined_call_operand.vmem [shape: bf16[128,16], index: 3, kind: input, shape index: {}]
  %s4 = inlined_call_operand.vmem [shape: f32[1,16], index: 4, kind: input, shape index: {}]
  %s5 = inlined_call_operand.hbm [shape: f32[8,16], index: 5, kind: output, shape index: {}]
  %s6 = sld [smem:[#allocation0]]
  $region30: #{tpu_custom_call.1} parent=0
    _
  %s8 = ssub.s32 1, %s6
  %s9 = scalar_select 0, %s8, %s6
  $region1: #{tpu_custom_call.1} parent=0
    #allocation2 [shape = 'u8[4096]{0}', space=vmem, size = 0x1000, scoped, tag = 'output window, operand 0, single buffered']
    #allocation3 [shape = 's32[1]{0}', space=sflag, size = 0x4, scoped, tag = 'scoped memory for tpu_custom_call.1']
    %10 = vsyncpa [#allocation3], 0
    // Predicated region
    $region2: #{tpu_custom_call.1} parent=1 // pred_check
      _
    $region3: #{tpu_custom_call.1} parent=1 // pred_check_branch
      %12 = sbr.rel (0) target = $region5
    $region4: #{tpu_custom_call.1} parent=1 // pred_region
      _
    $region5: #{tpu_custom_call.1} parent=1 // pred_fallthru
      _
    // Predicated region
    $region6: #{tpu_custom_call.1} parent=1 // pred_check
      _
    $region7: #{tpu_custom_call.1} parent=1 // pred_check_branch
      %14 = sbr.rel (0) target = $region9
    $region8: #{tpu_custom_call.1} parent=1 // pred_region
      _
    $region9: #{tpu_custom_call.1} parent=1 // pred_fallthru
      _
    // Predicated region
    $region10: #{tpu_custom_call.1} parent=1 // pred_check
      _
    $region11: #{tpu_custom_call.1} parent=1 // pred_check_branch
      %16 = sbr.rel (0) target = $region13
    $region12: #{tpu_custom_call.1} parent=1 // pred_region
      _
    $region13: #{tpu_custom_call.1} parent=1 // pred_fallthru
      _
    // Predicated region
    $region14: #{tpu_custom_call.1} parent=1 // pred_check
      _
    $region15: #{tpu_custom_call.1} parent=1 // pred_check_branch
      %18 = sbr.rel (0) target = $region17
    $region16: #{tpu_custom_call.1} parent=1 // pred_region
      _
    $region17: #{tpu_custom_call.1} parent=1 // pred_fallthru
      _
    // Predicated region
    $region18: #{tpu_custom_call.1} parent=1 // pred_check
      _
    $region19: #{tpu_custom_call.1} parent=1 // pred_check_branch
      %20 = sbr.rel (0) target = $region21
    $region20: #{tpu_custom_call.1} parent=1 // pred_region
      _
    $region21: #{tpu_custom_call.1} parent=1 // pred_fallthru
      _
    %v21 = vld [vmem:[%s0] sm:$0xff]
    %v22 = vpack.c.bf16 %v21, %v21
    %v23 = vld [vmem:[%s1] sm:$0xff]
    %v24 = vpack.c.bf16 %v23, %v23
    %v25 = vld [vmem:[%s2] sm:$0xf]
    %v26 = vld [vmem:[%s2 + $0x4] sm:$0xf]
    %v27 = vld [vmem:[%s2 + $0x8] sm:$0xf]
    %v28 = vld [vmem:[%s2 + $0xc] sm:$0xf]
    %v29 = vld [vmem:[%s2 + $0x10] sm:$0xf]
    %v30 = vld [vmem:[%s2 + $0x14] sm:$0xf]
    %v31 = vld [vmem:[%s2 + $0x18] sm:$0xf]
    %v32 = vld [vmem:[%s2 + $0x1c] sm:$0xf]
    %v33 = vld [vmem:[%s2 + $0x20] sm:$0xf]
    %v34 = vld [vmem:[%s2 + $0x24] sm:$0xf]
    %v35 = vld [vmem:[%s2 + $0x28] sm:$0xf]
    %v36 = vld [vmem:[%s2 + $0x2c] sm:$0xf]
    %v37 = vld [vmem:[%s2 + $0x30] sm:$0xf]
    %v38 = vld [vmem:[%s2 + $0x34] sm:$0xf]
    %v39 = vld [vmem:[%s2 + $0x38] sm:$0xf]
    %v40 = vld [vmem:[%s2 + $0x3c] sm:$0xf]
    %v41 = vld [vmem:[%s3] sm:$0xf]
    %v42 = vld [vmem:[%s3 + $0x4] sm:$0xf]
    %v43 = vld [vmem:[%s3 + $0x8] sm:$0xf]
    %v44 = vld [vmem:[%s3 + $0xc] sm:$0xf]
    %v45 = vld [vmem:[%s3 + $0x10] sm:$0xf]
    %v46 = vld [vmem:[%s3 + $0x14] sm:$0xf]
    %v47 = vld [vmem:[%s3 + $0x18] sm:$0xf]
    %v48 = vld [vmem:[%s3 + $0x1c] sm:$0xf]
    %v49 = vld [vmem:[%s3 + $0x20] sm:$0xf]
    %v50 = vld [vmem:[%s3 + $0x24] sm:$0xf]
    %v51 = vld [vmem:[%s3 + $0x28] sm:$0xf]
    %v52 = vld [vmem:[%s3 + $0x2c] sm:$0xf]
    %v53 = vld [vmem:[%s3 + $0x30] sm:$0xf]
    %v54 = vld [vmem:[%s3 + $0x34] sm:$0xf]
    %v55 = vld [vmem:[%s3 + $0x38] sm:$0xf]
    %v56 = vld [vmem:[%s3 + $0x3c] sm:$0xf]
    %v73 = vunpack.c.l.b16 %v41
    %v74 = vunpack.c.l.b16 %v42
    %v75 = vunpack.c.l.b16 %v43
    %v76 = vunpack.c.l.b16 %v44
    %v77 = vunpack.c.l.b16 %v45
    %v78 = vunpack.c.l.b16 %v46
    %v79 = vunpack.c.l.b16 %v47
    %v80 = vunpack.c.l.b16 %v48
    %v81 = vunpack.c.l.b16 %v49
    %v82 = vunpack.c.l.b16 %v50
    %v83 = vunpack.c.l.b16 %v51
    %v84 = vunpack.c.l.b16 %v52
    %v85 = vunpack.c.l.b16 %v53
    %v86 = vunpack.c.l.b16 %v54
    %v87 = vunpack.c.l.b16 %v55
    %v88 = vunpack.c.l.b16 %v56
    %v89 = vpack.c.b16 %v74, %v73
    %v90 = vpack.c.b16 %v76, %v75
    %v91 = vpack.c.b16 %v78, %v77
    %v92 = vpack.c.b16 %v80, %v79
    %v93 = vpack.c.b16 %v82, %v81
    %v94 = vpack.c.b16 %v84, %v83
    %v95 = vpack.c.b16 %v86, %v85
    %v96 = vpack.c.b16 %v88, %v87
    %105 = vmatpush.bf16.msra.mxu0 %v96
    %106 = vmatpush.bf16.msra.mxu0 %v95
    %107 = vmatpush.bf16.msra.mxu0 %v94
    %108 = vmatpush.bf16.msra.mxu0 %v93
    %109 = vmatpush.bf16.msra.mxu0 %v92
    %110 = vmatpush.bf16.msra.mxu0 %v91
    %111 = vmatpush.bf16.msra.mxu0 %v90
    %112 = vmatpush.bf16.msra.mxu0 %v89
    %113 = vmatmul.bf16.gmra.mxu0 %v24
    %v114 = vpop.f32.mrf.mxu0
    %v115 = vadd.f32 0.0, %v114
    %v116 = vpop.f32.mrf.mxu0
    %117 = vdwg.mxu0
    %v134 = vunpack.c.l.b16 %v25
    %v135 = vunpack.c.l.b16 %v26
    %v136 = vunpack.c.l.b16 %v27
    %v137 = vunpack.c.l.b16 %v28
    %v138 = vunpack.c.l.b16 %v29
    %v139 = vunpack.c.l.b16 %v30
    %v140 = vunpack.c.l.b16 %v31
    %v141 = vunpack.c.l.b16 %v32
    %v142 = vunpack.c.l.b16 %v33
    %v143 = vunpack.c.l.b16 %v34
    %v144 = vunpack.c.l.b16 %v35
    %v145 = vunpack.c.l.b16 %v36
    %v146 = vunpack.c.l.b16 %v37
    %v147 = vunpack.c.l.b16 %v38
    %v148 = vunpack.c.l.b16 %v39
    %v149 = vunpack.c.l.b16 %v40
    %v150 = vpack.c.b16 %v135, %v134
    %v151 = vpack.c.b16 %v137, %v136
    %v152 = vpack.c.b16 %v139, %v138
    %v153 = vpack.c.b16 %v141, %v140
    %v154 = vpack.c.b16 %v143, %v142
    %v155 = vpack.c.b16 %v145, %v144
    %v156 = vpack.c.b16 %v147, %v146
    %v157 = vpack.c.b16 %v149, %v148
    %166 = vmatpush.bf16.msra.mxu0 %v157
    %167 = vmatpush.bf16.msra.mxu0 %v156
    %168 = vmatpush.bf16.msra.mxu0 %v155
    %169 = vmatpush.bf16.msra.mxu0 %v154
    %170 = vmatpush.bf16.msra.mxu0 %v153
    %171 = vmatpush.bf16.msra.mxu0 %v152
    %172 = vmatpush.bf16.msra.mxu0 %v151
    %173 = vmatpush.bf16.msra.mxu0 %v150
    %174 = vmatmul.bf16.gmra.mxu0 %v22
    %v175 = vpop.f32.mrf.mxu0
    %v176 = vadd.f32 %v115, %v175
    %v177 = vpop.f32.mrf.mxu0
    %178 = vdwg.mxu0
    %v179 = vld [vmem:[%s4] sm:$0x1]
    %v181 = vperm.slane %v179, 0
    %v183 = vadd.f32 %v176, %v181
    %v184 = vsub.f32 0.0, %v183
    %v185 = vmul.f32 %v184, 1.442695
    %v186 = vpow.pop %v185
    %v187 = vadd.f32 %v186, 1.0
    %v188 = vrcp.pop %v187
    %vm189 = vcmask 130048
    %190 = vst.msk [vmem:[#allocation2] sm:$0xff] %vm189, %v188
    // Predicated region
    $region22: #{tpu_custom_call.1} parent=1 // pred_check
      _
    $region23: #{tpu_custom_call.1} parent=1 // pred_check_branch
      %192 = sbr.rel (0) target = $region25
    $region24: #{tpu_custom_call.1} parent=1 // pred_region
      %194 = vsyncadd [#allocation3], 0
      %s196 = sshll.u32 [#allocation2], 4
      %s197 = int_to_ptr.vmem [resolvable:$true] %s196
      %s198 = sshll.u32 %s5, 4
      %s199 = int_to_ptr.hbm [resolvable:$true] %s198
      %201 = dma.vmem_to_hbm [thread:$0]  %s197, 128, %s199, [#allocation3]
    $region25: #{tpu_custom_call.1} parent=1 // pred_fallthru
      _
    // Predicated region
    $region26: #{tpu_custom_call.1} parent=1 // pred_check
      _
    $region27: #{tpu_custom_call.1} parent=1 // pred_check_branch
      %203 = sbr.rel (0) target = $region29
    $region28: #{tpu_custom_call.1} parent=1 // pred_region
      %205 = dma.done [#allocation3], 128
    $region29: #{tpu_custom_call.1} parent=1 // pred_fallthru
      _
    %206 = vsyncpa [#allocation3], 1

</llo_original>
